<compile_context>
chip_gen: v7x
topology: tpu7x:2x2x1
jax: 0.10.0
libtpu: 0.0.40
codegen_flags: <defaults>
</compile_context>

<pallas_src>
import jax
import jax.numpy as jnp
from jax import lax
from jax.experimental import pallas as pl
from jax.experimental.pallas import tpu as pltpu


def _round_up(n, m):
    return ((n + m - 1) // m) * m


# ---------------------------------------------------------------------------
# Shared task-path algebra (all on (1, D)-sized data -- trivially cheap).
# ---------------------------------------------------------------------------
def _fold_task(mean_x, wphi, bphi, wmod, w1, b1, w2, b2, w3t, b3, E0, E1):
    """Collapse phi-encoder + FiLM + layers 1..3 into (w_tot (1,D), c_tot (1,1))."""
    task = jnp.dot(mean_x, wphi, preferred_element_type=jnp.float32) + bphi      # (1,D)
    # g1 | be1 | g2 | be2 in a single MXU push against the concatenated weight.
    mod = jnp.dot(task, wmod, preferred_element_type=jnp.float32)                # (1,2E0+2E1)
    g1 = mod[:, 0:E0]
    be1 = mod[:, E0:2 * E0]
    g2 = mod[:, 2 * E0:2 * E0 + E1]
    be2 = mod[:, 2 * E0 + E1:2 * E0 + 2 * E1]

    v2 = g2 * w3t                                                                # (1,E1)
    w_eff = lax.dot_general(v2, w2, (((1,), (1,)), ((), ())),
                            preferred_element_type=jnp.float32)                  # (1,E0)
    c1 = (jnp.sum(b2 * v2, axis=1, keepdims=True)
          + jnp.sum(be2 * w3t, axis=1, keepdims=True) + b3)                      # (1,1)

    u = g1 * w_eff                                                               # (1,E0)
    w_tot = lax.dot_general(u, w1, (((1,), (1,)), ((), ())),
                            preferred_element_type=jnp.float32)                  # (1,D)
    c_tot = (jnp.sum(b1 * u, axis=1, keepdims=True)
             + jnp.sum(be1 * w_eff, axis=1, keepdims=True) + c1)                 # (1,1)
    return w_tot, c_tot


# ---------------------------------------------------------------------------
# Path A: everything fused into one un-gridded kernel (x VMEM resident).
# ---------------------------------------------------------------------------
def _fused_kernel(x_ref, wphi_ref, bphi_ref, wmod_ref, w1_ref, b1_ref,
                  w2_ref, b2_ref, w3t_ref, b3_ref, out_ref):
    E0 = b1_ref.shape[1]
    E1 = b2_ref.shape[1]
    xv = x_ref[...]                                                  # (N, D)
    mean_x = jnp.mean(xv.astype(jnp.float32), axis=0, keepdims=True)  # (1, D)
    w_tot, c_tot = _fold_task(mean_x, wphi_ref[...], bphi_ref[...], wmod_ref[...],
                              w1_ref[...], b1_ref[...], w2_ref[...], b2_ref[...],
                              w3t_ref[...], b3_ref[...], E0, E1)
    # Lane-dense (1, N) output: out[0, n] = x[n, :] . w_tot + c_tot
    out_ref[...] = lax.dot_general(w_tot.astype(xv.dtype), xv,
                                   (((1,), (1,)), ((), ())),
                                   preferred_element_type=jnp.float32) + c_tot


# ---------------------------------------------------------------------------
# Path B (large N): tiny task kernel + row-tiled matvec kernel.
# ---------------------------------------------------------------------------
def _task_kernel(mean_ref, wphi_ref, bphi_ref, wmod_ref, w1_ref, b1_ref,
                 w2_ref, b2_ref, w3t_ref, b3_ref, wtot_ref, ctot_ref):
    E0 = b1_ref.shape[1]
    E1 = b2_ref.shape[1]
    w_tot, c_tot = _fold_task(mean_ref[...], wphi_ref[...], bphi_ref[...],
                              wmod_ref[...], w1_ref[...], b1_ref[...],
                              w2_ref[...], b2_ref[...], w3t_ref[...], b3_ref[...],
                              E0, E1)
    wtot_ref[...] = w_tot
    ctot_ref[...] = c_tot


def _matvec_kernel(x_ref, wtot_ref, ctot_ref, out_ref):
    xv = x_ref[...]                                                  # (tile_n, D)
    out_ref[...] = lax.dot_general(wtot_ref[...].astype(xv.dtype), xv,
                                   (((1,), (1,)), ((), ())),
                                   preferred_element_type=jnp.float32) + ctot_ref[...]


# ---------------------------------------------------------------------------
# Wrapper
# ---------------------------------------------------------------------------
def _weight_args(params):
    w_mod = params.get("w_mod")
    if w_mod is None:   # fallback if the caller did not cache the concat
        w_mod = jnp.concatenate([params["wg1"], params["wb1"],
                                 params["wg2"], params["wb2"]], axis=1)
    w3t = params.get("w3t")
    if w3t is None:
        w3t = params["w3"].T
    return (params["wphi"], params["bphi"], w_mod, params["w1"], params["b1"],
            params["w2"], params["b2"], w3t, params["b3"])


def user_adapting_modulator(x, params, *, tile_n=2048,
                            fused_vmem_budget=8 * 2 ** 20, force_gridded=False):
    """Forward pass of UserAdaptingModulator.  x: (N, D); returns (N, 1) f32."""
    N, D = x.shape
    weights = _weight_args(params)
    w_bytes = sum(int(w.size) * w.dtype.itemsize for w in weights)
    vmem = pl.BlockSpec(memory_space=pltpu.MemorySpace.VMEM)
    d_pad = _round_up(D, 128)

    # VMEM footprint of the fused path: x buffer + in-kernel f32 copy
    # + lane-padded (1, N) output + weights (with slack).
    fused_vmem_est = (_round_up(N, 8) * d_pad * (x.dtype.itemsize + 4)
                      + 8 * _round_up(N, 128) * 4 + 4 * w_bytes)

    if not force_gridded and fused_vmem_est <= fused_vmem_budget:
        # ---- Path A: one un-gridded kernel, single HBM pass over x ----
        flops = 3 * N * D + 4 * D * D            # matvec + mean + task path (approx)
        bytes_accessed = int(x.size) * x.dtype.itemsize + N * 4 + w_bytes
        out = pl.pallas_call(
            _fused_kernel,
            out_shape=jax.ShapeDtypeStruct((1, N), jnp.float32),
            in_specs=[vmem] * 10,
            out_specs=vmem,
            cost_estimate=pl.CostEstimate(flops=flops, transcendentals=0,
                                          bytes_accessed=bytes_accessed),
        )(x, *weights)
        return out.reshape(N, 1)

    # ---- Path B: large N ----
    mean_x = jnp.mean(x, axis=0, keepdims=True, dtype=jnp.float32)          # (1, D)

    w_tot, c_tot = pl.pallas_call(
        _task_kernel,
        out_shape=(jax.ShapeDtypeStruct((1, D), jnp.float32),
                   jax.ShapeDtypeStruct((1, 1), jnp.float32)),
        in_specs=[vmem] * 10,
        out_specs=(vmem, vmem),
    )(mean_x, *weights)

    # Row-tile sizing: large tiles amortize per-step overhead; keep >= 2 grid
    # steps (v7x megacore); clamp so the double-buffered x tile stays <= ~8 MiB
    # (v5e's default scoped VMEM is 16 MiB, so no vmem_limit flag is needed).
    tile_n = max(128, min(_round_up(tile_n, 128), _round_up(N, 128)))
    if N >= 256:
        tile_n = min(tile_n, max(128, _round_up(pl.cdiv(N, 2), 128)))
    max_rows = (8 * 2 ** 20) // (2 * d_pad * x.dtype.itemsize)
    max_rows = max(128, (max_rows // 128) * 128)
    tile_n = min(tile_n, max_rows)
    num_tiles = pl.cdiv(N, tile_n)   # no jnp.pad: Pallas masks the edge block

    flops = 2 * N * D + 2 * N
    bytes_accessed = int(x.size) * x.dtype.itemsize + N * 4 + D * 4 + 4
    out = pl.pallas_call(
        _matvec_kernel,
        out_shape=jax.ShapeDtypeStruct((1, N), jnp.float32),
        grid=(num_tiles,),
        in_specs=[
            pl.BlockSpec((tile_n, D), lambda i: (i, 0)),   # x row tile
            pl.BlockSpec((1, D), lambda i: (0, 0)),        # w_tot (resident)
            pl.BlockSpec((1, 1), lambda i: (0, 0)),        # c_tot (resident)
        ],
        out_specs=pl.BlockSpec((1, tile_n), lambda i: (0, i)),   # lane-dense rows
        compiler_params=pltpu.CompilerParams(
            dimension_semantics=("parallel",)),
        cost_estimate=pl.CostEstimate(flops=flops, transcendentals=0,
                                      bytes_accessed=bytes_accessed),
    )(x, w_tot, c_tot)
    return out.reshape(N, 1)


# ---------------------------------------------------------------------------
# Parameters / reference
# ---------------------------------------------------------------------------
def make_params(key, D, E0, E1):
    """Synthetic parameters (PyTorch Linear weights, stored as (in, out))."""
    ks = jax.random.split(key, 12)

    def w(k, fan_in, shape):
        return jax.random.normal(k, shape, jnp.float32) / jnp.sqrt(float(fan_in))

    p = {
        "wphi": w(ks[0], D, (D, D)),
        "bphi": 0.1 * jax.random.normal(ks[1], (1, D), jnp.float32),
        "w1":   w(ks[2], D, (D, E0)),
        "b1":   0.1 * jax.random.normal(ks[3], (1, E0), jnp.float32),
        "wg1":  w(ks[4], D, (D, E0)),
        "wb1":  w(ks[5], D, (D, E0)),
        "w2":   w(ks[6], E0, (E0, E1)),
        "b2":   0.1 * jax.random.normal(ks[7], (1, E1), jnp.float32),
        "wg2":  w(ks[8], D, (D, E1)),
        "wb2":  w(ks[9], D, (D, E1)),
        "w3":   w(ks[10], E1, (E1, 1)),
        "b3":   0.1 * jax.random.normal(ks[11], (1, 1), jnp.float32),
    }
    # Per-call preprocessing hoisted here (precomputed once, not per forward).
    p["w_mod"] = jnp.concatenate([p["wg1"], p["wb1"], p["wg2"], p["wb2"]], axis=1)
    p["w3t"] = p["w3"].T
    return p


def reference(x, p):
    mean_x = jnp.mean(x, axis=0, keepdims=True)
    task = mean_x @ p["wphi"] + p["bphi"]
    h1 = (task @ p["wg1"]) * (x @ p["w1"] + p["b1"]) + (task @ p["wb1"])
    h2 = (task @ p["wg2"]) * (h1 @ p["w2"] + p["b2"]) + (task @ p["wb2"])
    return h2 @ p["w3"] + p["b3"]


if __name__ == "__main__":
    key = jax.random.PRNGKey(0)
    k_x, k_p = jax.random.split(key)

    N, D = 1000, 32            # inter_num (not a tile multiple), emdeddingAllDims
    E0, E1 = 32, 16            # config['encoder_layer_dim']

    x = jax.random.normal(k_x, (N, D), jnp.float32)
    params = make_params(k_p, D, E0, E1)
    ref = reference(x, params)

    # Path A: fully fused single kernel (x VMEM-resident).
    out = jax.block_until_ready(user_adapting_modulator(x, params))
    assert out.shape == (N, 1)
    assert jnp.allclose(out, ref, atol=1e-5, rtol=1e-4), \
        float(jnp.max(jnp.abs(out - ref)))

    # Path B: row-tiled gridded kernel (forced), exercises the un-padded
    # partial edge block (N=1000, tile_n=512 -> 2 steps, last one masked).
    out_g = jax.block_until_ready(
        user_adapting_modulator(x, params, force_gridded=True, tile_n=512))
    assert out_g.shape == (N, 1)
    assert jnp.allclose(out_g, ref, atol=1e-5, rtol=1e-4), \
        float(jnp.max(jnp.abs(out_g - ref)))

    print("KERNEL_OK")
</pallas_src>

<mosaic_0001>
module attributes {stable_mosaic.version = 11 : i64} {
  func.func @_fused_kernel(%arg0: memref<1000x32xf32, #tpu.memory_space<vmem>>, %arg1: memref<32x32xf32, #tpu.memory_space<vmem>>, %arg2: memref<1x32xf32, #tpu.memory_space<vmem>>, %arg3: memref<32x96xf32, #tpu.memory_space<vmem>>, %arg4: memref<32x32xf32, #tpu.memory_space<vmem>>, %arg5: memref<1x32xf32, #tpu.memory_space<vmem>>, %arg6: memref<32x16xf32, #tpu.memory_space<vmem>>, %arg7: memref<1x16xf32, #tpu.memory_space<vmem>>, %arg8: memref<1x16xf32, #tpu.memory_space<vmem>>, %arg9: memref<1x1xf32, #tpu.memory_space<vmem>>, %arg10: memref<1x1000xf32, #tpu.memory_space<vmem>>) attributes {dimension_semantics = [], scalar_prefetch = 0 : i64, scratch_operands = 0 : i64, tpu.core_type = #tpu.core_type<tc>} {
    %c0 = arith.constant 0 : index
    %c0_0 = arith.constant 0 : index
    %0 = vector.load %arg0[%c0, %c0_0] : memref<1000x32xf32, #tpu.memory_space<vmem>>, vector<1000x32xf32>
    %cst = arith.constant dense<0.000000e+00> : vector<32xf32>
    %1 = vector.multi_reduction <add>, %0, %cst [0] : vector<1000x32xf32> to vector<32xf32>
    %2 = vector.shape_cast %1 : vector<32xf32> to vector<1x32xf32>
    %cst_1 = arith.constant 1.000000e+03 : f32
    %3 = vector.broadcast %cst_1 : f32 to vector<1x32xf32>
    %4 = arith.divf %2, %3 : vector<1x32xf32>
    %c0_2 = arith.constant 0 : index
    %c0_3 = arith.constant 0 : index
    %5 = vector.load %arg1[%c0_2, %c0_3] : memref<32x32xf32, #tpu.memory_space<vmem>>, vector<32x32xf32>
    %c0_4 = arith.constant 0 : index
    %c0_5 = arith.constant 0 : index
    %6 = vector.load %arg2[%c0_4, %c0_5] : memref<1x32xf32, #tpu.memory_space<vmem>>, vector<1x32xf32>
    %c0_6 = arith.constant 0 : index
    %c0_7 = arith.constant 0 : index
    %7 = vector.load %arg3[%c0_6, %c0_7] : memref<32x96xf32, #tpu.memory_space<vmem>>, vector<32x96xf32>
    %c0_8 = arith.constant 0 : index
    %c0_9 = arith.constant 0 : index
    %8 = vector.load %arg4[%c0_8, %c0_9] : memref<32x32xf32, #tpu.memory_space<vmem>>, vector<32x32xf32>
    %c0_10 = arith.constant 0 : index
    %c0_11 = arith.constant 0 : index
    %9 = vector.load %arg5[%c0_10, %c0_11] : memref<1x32xf32, #tpu.memory_space<vmem>>, vector<1x32xf32>
    %c0_12 = arith.constant 0 : index
    %c0_13 = arith.constant 0 : index
    %10 = vector.load %arg6[%c0_12, %c0_13] : memref<32x16xf32, #tpu.memory_space<vmem>>, vector<32x16xf32>
    %c0_14 = arith.constant 0 : index
    %c0_15 = arith.constant 0 : index
    %11 = vector.load %arg7[%c0_14, %c0_15] : memref<1x16xf32, #tpu.memory_space<vmem>>, vector<1x16xf32>
    %c0_16 = arith.constant 0 : index
    %c0_17 = arith.constant 0 : index
    %12 = vector.load %arg8[%c0_16, %c0_17] : memref<1x16xf32, #tpu.memory_space<vmem>>, vector<1x16xf32>
    %c0_18 = arith.constant 0 : index
    %c0_19 = arith.constant 0 : index
    %13 = vector.load %arg9[%c0_18, %c0_19] : memref<1x1xf32, #tpu.memory_space<vmem>>, vector<1x1xf32>
    %cst_20 = arith.constant dense<0.000000e+00> : vector<1x32xf32>
    %14 = tpu.matmul %4, %5, %cst_20 {dimension_numbers = #tpu.dot_dimension_numbers<[1], [0], [0], [1], [0, 0, 1, 1], [], []>} : vector<1x32xf32>, vector<32x32xf32>, vector<1x32xf32> -> vector<1x32xf32>
    %15 = arith.addf %14, %6 : vector<1x32xf32>
    %cst_21 = arith.constant dense<0.000000e+00> : vector<1x96xf32>
    %16 = tpu.matmul %15, %7, %cst_21 {dimension_numbers = #tpu.dot_dimension_numbers<[1], [0], [0], [1], [0, 0, 1, 1], [], []>} : vector<1x32xf32>, vector<32x96xf32>, vector<1x96xf32> -> vector<1x96xf32>
    %17 = vector.extract_strided_slice %16 {offsets = [0, 0], sizes = [1, 32], strides = [1, 1]} : vector<1x96xf32> to vector<1x32xf32>
    %18 = vector.extract_strided_slice %16 {offsets = [0, 32], sizes = [1, 32], strides = [1, 1]} : vector<1x96xf32> to vector<1x32xf32>
    %19 = vector.extract_strided_slice %16 {offsets = [0, 64], sizes = [1, 16], strides = [1, 1]} : vector<1x96xf32> to vector<1x16xf32>
    %20 = vector.extract_strided_slice %16 {offsets = [0, 80], sizes = [1, 16], strides = [1, 1]} : vector<1x96xf32> to vector<1x16xf32>
    %21 = arith.mulf %19, %12 : vector<1x16xf32>
    %cst_22 = arith.constant dense<0.000000e+00> : vector<1x32xf32>
    %22 = tpu.matmul %21, %10, %cst_22 {dimension_numbers = #tpu.dot_dimension_numbers<[1], [1], [0], [0], [0, 0, 1, 0], [], []>} : vector<1x16xf32>, vector<32x16xf32>, vector<1x32xf32> -> vector<1x32xf32>
    %23 = arith.mulf %11, %21 : vector<1x16xf32>
    %cst_23 = arith.constant dense<0.000000e+00> : vector<1xf32>
    %24 = vector.multi_reduction <add>, %23, %cst_23 [1] : vector<1x16xf32> to vector<1xf32>
    %25 = vector.shape_cast %24 : vector<1xf32> to vector<1x1xf32>
    %26 = arith.mulf %20, %12 : vector<1x16xf32>
    %cst_24 = arith.constant dense<0.000000e+00> : vector<1xf32>
    %27 = vector.multi_reduction <add>, %26, %cst_24 [1] : vector<1x16xf32> to vector<1xf32>
    %28 = vector.shape_cast %27 : vector<1xf32> to vector<1x1xf32>
    %29 = arith.addf %25, %28 : vector<1x1xf32>
    %30 = arith.addf %29, %13 : vector<1x1xf32>
    %31 = arith.mulf %17, %22 : vector<1x32xf32>
    %cst_25 = arith.constant dense<0.000000e+00> : vector<1x32xf32>
    %32 = tpu.matmul %31, %8, %cst_25 {dimension_numbers = #tpu.dot_dimension_numbers<[1], [1], [0], [0], [0, 0, 1, 0], [], []>} : vector<1x32xf32>, vector<32x32xf32>, vector<1x32xf32> -> vector<1x32xf32>
    %33 = arith.mulf %9, %31 : vector<1x32xf32>
    %cst_26 = arith.constant dense<0.000000e+00> : vector<1xf32>
    %34 = vector.multi_reduction <add>, %33, %cst_26 [1] : vector<1x32xf32> to vector<1xf32>
    %35 = vector.shape_cast %34 : vector<1xf32> to vector<1x1xf32>
    %36 = arith.mulf %18, %22 : vector<1x32xf32>
    %cst_27 = arith.constant dense<0.000000e+00> : vector<1xf32>
    %37 = vector.multi_reduction <add>, %36, %cst_27 [1] : vector<1x32xf32> to vector<1xf32>
    %38 = vector.shape_cast %37 : vector<1xf32> to vector<1x1xf32>
    %39 = arith.addf %35, %38 : vector<1x1xf32>
    %40 = arith.addf %39, %30 : vector<1x1xf32>
    %cst_28 = arith.constant dense<0.000000e+00> : vector<1x1000xf32>
    %41 = tpu.matmul %32, %0, %cst_28 {dimension_numbers = #tpu.dot_dimension_numbers<[1], [1], [0], [0], [0, 0, 1, 0], [], []>} : vector<1x32xf32>, vector<1000x32xf32>, vector<1x1000xf32> -> vector<1x1000xf32>
    %42 = vector.broadcast %40 : vector<1x1xf32> to vector<1x1000xf32>
    %43 = arith.addf %41, %42 : vector<1x1000xf32>
    %c0_29 = arith.constant 0 : index
    %c0_30 = arith.constant 0 : index
    %44 = vector.load %arg10[%c0_29, %c0_30] : memref<1x1000xf32, #tpu.memory_space<vmem>>, vector<1x1000xf32>
    tpu.vector_store %arg10[%c0_29, %c0_30], %43 {strides = array<i32>} : memref<1x1000xf32, #tpu.memory_space<vmem>>, vector<1x1000xf32>,
    return
  }
}

</mosaic_0001>

<llo_original>
// kernel: tpu_custom_call.1
$region0: #{tpu_custom_call.1}
  #allocation0 [shape = 'u32[]', space=smem, size = 0x4, offset = 0x4, fixed_abs, tag = 'smem constant byte address 0x4 - core index']
  #allocation1 [shape = 'u32[144,128]{1,0:T(1,128)}', space=vmem, size = 0x12000, scoped, tag = 'internal scratch']
  #allocation2 [shape = 'f32[1,1]{1,0:T(1,128)S(1)}', space=vmem, size = 0x200, scoped, tag = 'scoped memory for tpu_custom_call.1']
  %s0 = inlined_call_operand.vmem [shape: f32[1000,32], index: 0, kind: input, shape index: {}]
  %s1 = inlined_call_operand.vmem [shape: f32[32,32], index: 1, kind: input, shape index: {}]
  %s2 = inlined_call_operand.vmem [shape: f32[1,32], index: 2, kind: input, shape index: {}]
  %s3 = inlined_call_operand.vmem [shape: f32[32,96], index: 3, kind: input, shape index: {}]
  %s4 = inlined_call_operand.vmem [shape: f32[32,32], index: 4, kind: input, shape index: {}]
  %s5 = inlined_call_operand.vmem [shape: f32[1,32], index: 5, kind: input, shape index: {}]
  %s6 = inlined_call_operand.vmem [shape: f32[32,16], index: 6, kind: input, shape index: {}]
  %s7 = inlined_call_operand.vmem [shape: f32[1,16], index: 7, kind: input, shape index: {}]
  %s8 = inlined_call_operand.vmem [shape: f32[1,16], index: 8, kind: input, shape index: {}]
  %s9 = inlined_call_operand.<no memory space> [shape: f32[1,1], index: 9, kind: input, shape index: {}]
  %s10 = inlined_call_operand.hbm [shape: f32[1,1000], index: 10, kind: output, shape index: {}]
  %s11 = sld [smem:[#allocation0]]
  $region50: #{tpu_custom_call.1} parent=0
    _
  %s13 = ssub.s32 1, %s11
  %s14 = scalar_select 0, %s13, %s11
  %v15 = vstv %s9
  %16 = vst [vmem:[#allocation2] sm:$0x1] %v15
  $region1: #{tpu_custom_call.1} parent=0
    #allocation3 [shape = 'u8[4096]{0}', space=vmem, size = 0x1000, scoped, tag = 'output window, operand 0, single buffered']
    #allocation4 [shape = 's32[1]{0}', space=sflag, size = 0x4, scoped, tag = 'scoped memory for tpu_custom_call.1']
    %17 = vsyncpa [#allocation4], 0
    // Predicated region
    $region2: #{tpu_custom_call.1} parent=1 // pred_check
      _
    $region3: #{tpu_custom_call.1} parent=1 // pred_check_branch
      %19 = sbr.rel (0) target = $region5
    $region4: #{tpu_custom_call.1} parent=1 // pred_region
      _
    $region5: #{tpu_custom_call.1} parent=1 // pred_fallthru
      _
    // Predicated region
    $region6: #{tpu_custom_call.1} parent=1 // pred_check
      _
    $region7: #{tpu_custom_call.1} parent=1 // pred_check_branch
      %21 = sbr.rel (0) target = $region9
    $region8: #{tpu_custom_call.1} parent=1 // pred_region
      _
    $region9: #{tpu_custom_call.1} parent=1 // pred_fallthru
      _
    // Predicated region
    $region10: #{tpu_custom_call.1} parent=1 // pred_check
      _
    $region11: #{tpu_custom_call.1} parent=1 // pred_check_branch
      %23 = sbr.rel (0) target = $region13
    $region12: #{tpu_custom_call.1} parent=1 // pred_region
      _
    $region13: #{tpu_custom_call.1} parent=1 // pred_fallthru
      _
    // Predicated region
    $region14: #{tpu_custom_call.1} parent=1 // pred_check
      _
    $region15: #{tpu_custom_call.1} parent=1 // pred_check_branch
      %25 = sbr.rel (0) target = $region17
    $region16: #{tpu_custom_call.1} parent=1 // pred_region
      _
    $region17: #{tpu_custom_call.1} parent=1 // pred_fallthru
      _
    // Predicated region
    $region18: #{tpu_custom_call.1} parent=1 // pred_check
      _
    $region19: #{tpu_custom_call.1} parent=1 // pred_check_branch
      %27 = sbr.rel (0) target = $region21
    $region20: #{tpu_custom_call.1} parent=1 // pred_region
      _
    $region21: #{tpu_custom_call.1} parent=1 // pred_fallthru
      _
    // Predicated region
    $region22: #{tpu_custom_call.1} parent=1 // pred_check
      _
    $region23: #{tpu_custom_call.1} parent=1 // pred_check_branch
      %29 = sbr.rel (0) target = $region25
    $region24: #{tpu_custom_call.1} parent=1 // pred_region
      _
    $region25: #{tpu_custom_call.1} parent=1 // pred_fallthru
      _
    // Predicated region
    $region26: #{tpu_custom_call.1} parent=1 // pred_check
      _
    $region27: #{tpu_custom_call.1} parent=1 // pred_check_branch
      %31 = sbr.rel (0) target = $region29
    $region28: #{tpu_custom_call.1} parent=1 // pred_region
      _
    $region29: #{tpu_custom_call.1} parent=1 // pred_fallthru
      _
    // Predicated region
    $region30: #{tpu_custom_call.1} parent=1 // pred_check
      _
    $region31: #{tpu_custom_call.1} parent=1 // pred_check_branch
      %33 = sbr.rel (0) target = $region33
    $region32: #{tpu_custom_call.1} parent=1 // pred_region
      _
    $region33: #{tpu_custom_call.1} parent=1 // pred_fallthru
      _
    // Predicated region
    $region34: #{tpu_custom_call.1} parent=1 // pred_check
      _
    $region35: #{tpu_custom_call.1} parent=1 // pred_check_branch
      %35 = sbr.rel (0) target = $region37
    $region36: #{tpu_custom_call.1} parent=1 // pred_region
      _
    $region37: #{tpu_custom_call.1} parent=1 // pred_fallthru
      _
    // Predicated region
    $region38: #{tpu_custom_call.1} parent=1 // pred_check
      _
    $region39: #{tpu_custom_call.1} parent=1 // pred_check_branch
      %37 = sbr.rel (0) target = $region41
    $region40: #{tpu_custom_call.1} parent=1 // pred_region
      _
    $region41: #{tpu_custom_call.1} parent=1 // pred_fallthru
      _
    %v38 = vld [vmem:[%s0] sm:$0xff]
    %v39 = vld [vmem:[%s0 + $0x8] sm:$0xff]
    %v40 = vld [vmem:[%s0 + $0x10] sm:$0xff]
    %v41 = vld [vmem:[%s0 + $0x18] sm:$0xff]
    %v42 = vld [vmem:[%s0 + $0x20] sm:$0xff]
    %v43 = vld [vmem:[%s0 + $0x28] sm:$0xff]
    %v44 = vld [vmem:[%s0 + $0x30] sm:$0xff]
    %v45 = vld [vmem:[%s0 + $0x38] sm:$0xff]
    %v46 = vld [vmem:[%s0 + $0x40] sm:$0xff]
    %v47 = vld [vmem:[%s0 + $0x48] sm:$0xff]
    %v48 = vld [vmem:[%s0 + $0x50] sm:$0xff]
    %v49 = vld [vmem:[%s0 + $0x58] sm:$0xff]
    %v50 = vld [vmem:[%s0 + $0x60] sm:$0xff]
    %v51 = vld [vmem:[%s0 + $0x68] sm:$0xff]
    %v52 = vld [vmem:[%s0 + $0x70] sm:$0xff]
    %v53 = vld [vmem:[%s0 + $0x78] sm:$0xff]
    %v54 = vld [vmem:[%s0 + $0x80] sm:$0xff]
    %v55 = vld [vmem:[%s0 + $0x88] sm:$0xff]
    %v56 = vld [vmem:[%s0 + $0x90] sm:$0xff]
    %v57 = vld [vmem:[%s0 + $0x98] sm:$0xff]
    %v58 = vld [vmem:[%s0 + $0xa0] sm:$0xff]
    %v59 = vld [vmem:[%s0 + $0xa8] sm:$0xff]
    %v60 = vld [vmem:[%s0 + $0xb0] sm:$0xff]
    %v61 = vld [vmem:[%s0 + $0xb8] sm:$0xff]
    %v62 = vld [vmem:[%s0 + $0xc0] sm:$0xff]
    %v63 = vld [vmem:[%s0 + $0xc8] sm:$0xff]
    %v64 = vld [vmem:[%s0 + $0xd0] sm:$0xff]
    %v65 = vld [vmem:[%s0 + $0xd8] sm:$0xff]
    %v66 = vld [vmem:[%s0 + $0xe0] sm:$0xff]
    %v67 = vld [vmem:[%s0 + $0xe8] sm:$0xff]
    %v68 = vld [vmem:[%s0 + $0xf0] sm:$0xff]
    %v69 = vld [vmem:[%s0 + $0xf8] sm:$0xff]
    %v70 = vld [vmem:[%s0 + $0x100] sm:$0xff]
    %v71 = vld [vmem:[%s0 + $0x108] sm:$0xff]
    %v72 = vld [vmem:[%s0 + $0x110] sm:$0xff]
    %v73 = vld [vmem:[%s0 + $0x118] sm:$0xff]
    %v74 = vld [vmem:[%s0 + $0x120] sm:$0xff]
    %v75 = vld [vmem:[%s0 + $0x128] sm:$0xff]
    %v76 = vld [vmem:[%s0 + $0x130] sm:$0xff]
    %v77 = vld [vmem:[%s0 + $0x138] sm:$0xff]
    %v78 = vld [vmem:[%s0 + $0x140] sm:$0xff]
    %v79 = vld [vmem:[%s0 + $0x148] sm:$0xff]
    %v80 = vld [vmem:[%s0 + $0x150] sm:$0xff]
    %v81 = vld [vmem:[%s0 + $0x158] sm:$0xff]
    %v82 = vld [vmem:[%s0 + $0x160] sm:$0xff]
    %v83 = vld [vmem:[%s0 + $0x168] sm:$0xff]
    %v84 = vld [vmem:[%s0 + $0x170] sm:$0xff]
    %v85 = vld [vmem:[%s0 + $0x178] sm:$0xff]
    %v86 = vld [vmem:[%s0 + $0x180] sm:$0xff]
    %v87 = vld [vmem:[%s0 + $0x188] sm:$0xff]
    %v88 = vld [vmem:[%s0 + $0x190] sm:$0xff]
    %v89 = vld [vmem:[%s0 + $0x198] sm:$0xff]
    %v90 = vld [vmem:[%s0 + $0x1a0] sm:$0xff]
    %v91 = vld [vmem:[%s0 + $0x1a8] sm:$0xff]
    %v92 = vld [vmem:[%s0 + $0x1b0] sm:$0xff]
    %v93 = vld [vmem:[%s0 + $0x1b8] sm:$0xff]
    %v94 = vld [vmem:[%s0 + $0x1c0] sm:$0xff]
    %v95 = vld [vmem:[%s0 + $0x1c8] sm:$0xff]
    %v96 = vld [vmem:[%s0 + $0x1d0] sm:$0xff]
    %v97 = vld [vmem:[%s0 + $0x1d8] sm:$0xff]
    %v98 = vld [vmem:[%s0 + $0x1e0] sm:$0xff]
    %v99 = vld [vmem:[%s0 + $0x1e8] sm:$0xff]
    %v100 = vld [vmem:[%s0 + $0x1f0] sm:$0xff]
    %v101 = vld [vmem:[%s0 + $0x1f8] sm:$0xff]
    %v102 = vld [vmem:[%s0 + $0x200] sm:$0xff]
    %v103 = vld [vmem:[%s0 + $0x208] sm:$0xff]
    %v104 = vld [vmem:[%s0 + $0x210] sm:$0xff]
    %v105 = vld [vmem:[%s0 + $0x218] sm:$0xff]
    %v106 = vld [vmem:[%s0 + $0x220] sm:$0xff]
    %v107 = vld [vmem:[%s0 + $0x228] sm:$0xff]
    %v108 = vld [vmem:[%s0 + $0x230] sm:$0xff]
    %v109 = vld [vmem:[%s0 + $0x238] sm:$0xff]
    %v110 = vld [vmem:[%s0 + $0x240] sm:$0xff]
    %v111 = vld [vmem:[%s0 + $0x248] sm:$0xff]
    %v112 = vld [vmem:[%s0 + $0x250] sm:$0xff]
    %v113 = vld [vmem:[%s0 + $0x258] sm:$0xff]
    %v114 = vld [vmem:[%s0 + $0x260] sm:$0xff]
    %v115 = vld [vmem:[%s0 + $0x268] sm:$0xff]
    %v116 = vld [vmem:[%s0 + $0x270] sm:$0xff]
    %v117 = vld [vmem:[%s0 + $0x278] sm:$0xff]
    %v118 = vld [vmem:[%s0 + $0x280] sm:$0xff]
    %v119 = vld [vmem:[%s0 + $0x288] sm:$0xff]
    %v120 = vld [vmem:[%s0 + $0x290] sm:$0xff]
    %v121 = vld [vmem:[%s0 + $0x298] sm:$0xff]
    %v122 = vld [vmem:[%s0 + $0x2a0] sm:$0xff]
    %v123 = vld [vmem:[%s0 + $0x2a8] sm:$0xff]
    %v124 = vld [vmem:[%s0 + $0x2b0] sm:$0xff]
    %v125 = vld [vmem:[%s0 + $0x2b8] sm:$0xff]
    %v126 = vld [vmem:[%s0 + $0x2c0] sm:$0xff]
    %v127 = vld [vmem:[%s0 + $0x2c8] sm:$0xff]
    %v128 = vld [vmem:[%s0 + $0x2d0] sm:$0xff]
    %v129 = vld [vmem:[%s0 + $0x2d8] sm:$0xff]
    %v130 = vld [vmem:[%s0 + $0x2e0] sm:$0xff]
    %v131 = vld [vmem:[%s0 + $0x2e8] sm:$0xff]
    %v132 = vld [vmem:[%s0 + $0x2f0] sm:$0xff]
    %v133 = vld [vmem:[%s0 + $0x2f8] sm:$0xff]
    %v134 = vld [vmem:[%s0 + $0x300] sm:$0xff]
    %v135 = vld [vmem:[%s0 + $0x308] sm:$0xff]
    %v136 = vld [vmem:[%s0 + $0x310] sm:$0xff]
    %v137 = vld [vmem:[%s0 + $0x318] sm:$0xff]
    %v138 = vld [vmem:[%s0 + $0x320] sm:$0xff]
    %v139 = vld [vmem:[%s0 + $0x328] sm:$0xff]
    %v140 = vld [vmem:[%s0 + $0x330] sm:$0xff]
    %v141 = vld [vmem:[%s0 + $0x338] sm:$0xff]
    %v142 = vld [vmem:[%s0 + $0x340] sm:$0xff]
    %v143 = vld [vmem:[%s0 + $0x348] sm:$0xff]
    %v144 = vld [vmem:[%s0 + $0x350] sm:$0xff]
    %v145 = vld [vmem:[%s0 + $0x358] sm:$0xff]
    %v146 = vld [vmem:[%s0 + $0x360] sm:$0xff]
    %v147 = vld [vmem:[%s0 + $0x368] sm:$0xff]
    %v148 = vld [vmem:[%s0 + $0x370] sm:$0xff]
    %v149 = vld [vmem:[%s0 + $0x378] sm:$0xff]
    %v150 = vld [vmem:[%s0 + $0x380] sm:$0xff]
    %v151 = vld [vmem:[%s0 + $0x388] sm:$0xff]
    %v152 = vld [vmem:[%s0 + $0x390] sm:$0xff]
    %v153 = vld [vmem:[%s0 + $0x398] sm:$0xff]
    %v154 = vld [vmem:[%s0 + $0x3a0] sm:$0xff]
    %v155 = vld [vmem:[%s0 + $0x3a8] sm:$0xff]
    %v156 = vld [vmem:[%s0 + $0x3b0] sm:$0xff]
    %v157 = vld [vmem:[%s0 + $0x3b8] sm:$0xff]
    %v158 = vld [vmem:[%s0 + $0x3c0] sm:$0xff]
    %v159 = vld [vmem:[%s0 + $0x3c8] sm:$0xff]
    %v160 = vld [vmem:[%s0 + $0x3d0] sm:$0xff]
    %v161 = vld [vmem:[%s0 + $0x3d8] sm:$0xff]
    %v162 = vld [vmem:[%s0 + $0x3e0] sm:$0xff]
    %vm163 = vcmask 261120
    %v164 = vsel %vm163, %v38, 0.0
    %v165 = vsel %vm163, %v39, 0.0
    %v166 = vadd.f32 %v164, %v165
    %v167 = vsel %vm163, %v40, 0.0
    %v168 = vadd.f32 %v166, %v167
    %v169 = vsel %vm163, %v41, 0.0
    %v170 = vadd.f32 %v168, %v169
    %v171 = vsel %vm163, %v42, 0.0
    %v172 = vadd.f32 %v170, %v171
    %v173 = vsel %vm163, %v43, 0.0
    %v174 = vadd.f32 %v172, %v173
    %v175 = vsel %vm163, %v44, 0.0
    %v176 = vadd.f32 %v174, %v175
    %v177 = vsel %vm163, %v45, 0.0
    %v178 = vadd.f32 %v176, %v177
    %v179 = vsel %vm163, %v46, 0.0
    %v180 = vadd.f32 %v178, %v179
    %v181 = vsel %vm163, %v47, 0.0
    %v182 = vadd.f32 %v180, %v181
    %v183 = vsel %vm163, %v48, 0.0
    %v184 = vadd.f32 %v182, %v183
    %v185 = vsel %vm163, %v49, 0.0
    %v186 = vadd.f32 %v184, %v185
    %v187 = vsel %vm163, %v50, 0.0
    %v188 = vadd.f32 %v186, %v187
    %v189 = vsel %vm163, %v51, 0.0
    %v190 = vadd.f32 %v188, %v189
    %v191 = vsel %vm163, %v52, 0.0
    %v192 = vadd.f32 %v190, %v191
    %v193 = vsel %vm163, %v53, 0.0
    %v194 = vadd.f32 %v192, %v193
    %v195 = vsel %vm163, %v54, 0.0
    %v196 = vadd.f32 %v194, %v195
    %v197 = vsel %vm163, %v55, 0.0
    %v198 = vadd.f32 %v196, %v197
    %v199 = vsel %vm163, %v56, 0.0
    %v200 = vadd.f32 %v198, %v199
    %v201 = vsel %vm163, %v57, 0.0
    %v202 = vadd.f32 %v200, %v201
    %v203 = vsel %vm163, %v58, 0.0
    %v204 = vadd.f32 %v202, %v203
    %v205 = vsel %vm163, %v59, 0.0
    %v206 = vadd.f32 %v204, %v205
    %v207 = vsel %vm163, %v60, 0.0
    %v208 = vadd.f32 %v206, %v207
    %v209 = vsel %vm163, %v61, 0.0
    %v210 = vadd.f32 %v208, %v209
    %v211 = vsel %vm163, %v62, 0.0
    %v212 = vadd.f32 %v210, %v211
    %v213 = vsel %vm163, %v63, 0.0
    %v214 = vadd.f32 %v212, %v213
    %v215 = vsel %vm163, %v64, 0.0
    %v216 = vadd.f32 %v214, %v215
    %v217 = vsel %vm163, %v65, 0.0
    %v218 = vadd.f32 %v216, %v217
    %v219 = vsel %vm163, %v66, 0.0
    %v220 = vadd.f32 %v218, %v219
    %v221 = vsel %vm163, %v67, 0.0
    %v222 = vadd.f32 %v220, %v221
    %v223 = vsel %vm163, %v68, 0.0
    %v224 = vadd.f32 %v222, %v223
    %v225 = vsel %vm163, %v69, 0.0
    %v226 = vadd.f32 %v224, %v225
    %v227 = vsel %vm163, %v70, 0.0
    %v228 = vadd.f32 %v226, %v227
    %v229 = vsel %vm163, %v71, 0.0
    %v230 = vadd.f32 %v228, %v229
    %v231 = vsel %vm163, %v72, 0.0
    %v232 = vadd.f32 %v230, %v231
    %v233 = vsel %vm163, %v73, 0.0
    %v234 = vadd.f32 %v232, %v233
    %v235 = vsel %vm163, %v74, 0.0
    %v236 = vadd.f32 %v234, %v235
    %v237 = vsel %vm163, %v75, 0.0
    %v238 = vadd.f32 %v236, %v237
    %v239 = vsel %vm163, %v76, 0.0
    %v240 = vadd.f32 %v238, %v239
    %v241 = vsel %vm163, %v77, 0.0
    %v242 = vadd.f32 %v240, %v241
    %v243 = vsel %vm163, %v78, 0.0
    %v244 = vadd.f32 %v242, %v243
    %v245 = vsel %vm163, %v79, 0.0
    %v246 = vadd.f32 %v244, %v245
    %v247 = vsel %vm163, %v80, 0.0
    %v248 = vadd.f32 %v246, %v247
    %v249 = vsel %vm163, %v81, 0.0
    %v250 = vadd.f32 %v248, %v249
    %v251 = vsel %vm163, %v82, 0.0
    %v252 = vadd.f32 %v250, %v251
    %v253 = vsel %vm163, %v83, 0.0
    %v254 = vadd.f32 %v252, %v253
    %v255 = vsel %vm163, %v84, 0.0
    %v256 = vadd.f32 %v254, %v255
    %v257 = vsel %vm163, %v85, 0.0
    %v258 = vadd.f32 %v256, %v257
    %v259 = vsel %vm163, %v86, 0.0
    %v260 = vadd.f32 %v258, %v259
    %v261 = vsel %vm163, %v87, 0.0
    %v262 = vadd.f32 %v260, %v261
    %v263 = vsel %vm163, %v88, 0.0
    %v264 = vadd.f32 %v262, %v263
    %v265 = vsel %vm163, %v89, 0.0
    %v266 = vadd.f32 %v264, %v265
    %v267 = vsel %vm163, %v90, 0.0
    %v268 = vadd.f32 %v266, %v267
    %v269 = vsel %vm163, %v91, 0.0
    %v270 = vadd.f32 %v268, %v269
    %v271 = vsel %vm163, %v92, 0.0
    %v272 = vadd.f32 %v270, %v271
    %v273 = vsel %vm163, %v93, 0.0
    %v274 = vadd.f32 %v272, %v273
    %v275 = vsel %vm163, %v94, 0.0
    %v276 = vadd.f32 %v274, %v275
    %v277 = vsel %vm163, %v95, 0.0
    %v278 = vadd.f32 %v276, %v277
    %v279 = vsel %vm163, %v96, 0.0
    %v280 = vadd.f32 %v278, %v279
    %v281 = vsel %vm163, %v97, 0.0
    %v282 = vadd.f32 %v280, %v281
    %v283 = vsel %vm163, %v98, 0.0
    %v284 = vadd.f32 %v282, %v283
    %v285 = vsel %vm163, %v99, 0.0
    %v286 = vadd.f32 %v284, %v285
    %v287 = vsel %vm163, %v100, 0.0
    %v288 = vadd.f32 %v286, %v287
    %v289 = vsel %vm163, %v101, 0.0
    %v290 = vadd.f32 %v288, %v289
    %v291 = vsel %vm163, %v102, 0.0
    %v292 = vadd.f32 %v290, %v291
    %v293 = vsel %vm163, %v103, 0.0
    %v294 = vadd.f32 %v292, %v293
    %v295 = vsel %vm163, %v104, 0.0
    %v296 = vadd.f32 %v294, %v295
    %v297 = vsel %vm163, %v105, 0.0
    %v298 = vadd.f32 %v296, %v297
    %v299 = vsel %vm163, %v106, 0.0
    %v300 = vadd.f32 %v298, %v299
    %v301 = vsel %vm163, %v107, 0.0
    %v302 = vadd.f32 %v300, %v301
    %v303 = vsel %vm163, %v108, 0.0
    %v304 = vadd.f32 %v302, %v303
    %v305 = vsel %vm163, %v109, 0.0
    %v306 = vadd.f32 %v304, %v305
    %v307 = vsel %vm163, %v110, 0.0
    %v308 = vadd.f32 %v306, %v307
    %v309 = vsel %vm163, %v111, 0.0
    %v310 = vadd.f32 %v308, %v309
    %v311 = vsel %vm163, %v112, 0.0
    %v312 = vadd.f32 %v310, %v311
    %v313 = vsel %vm163, %v113, 0.0
    %v314 = vadd.f32 %v312, %v313
    %v315 = vsel %vm163, %v114, 0.0
    %v316 = vadd.f32 %v314, %v315
    %v317 = vsel %vm163, %v115, 0.0
    %v318 = vadd.f32 %v316, %v317
    %v319 = vsel %vm163, %v116, 0.0
    %v320 = vadd.f32 %v318, %v319
    %v321 = vsel %vm163, %v117, 0.0
    %v322 = vadd.f32 %v320, %v321
    %v323 = vsel %vm163, %v118, 0.0
    %v324 = vadd.f32 %v322, %v323
    %v325 = vsel %vm163, %v119, 0.0
    %v326 = vadd.f32 %v324, %v325
    %v327 = vsel %vm163, %v120, 0.0
    %v328 = vadd.f32 %v326, %v327
    %v329 = vsel %vm163, %v121, 0.0
    %v330 = vadd.f32 %v328, %v329
    %v331 = vsel %vm163, %v122, 0.0
    %v332 = vadd.f32 %v330, %v331
    %v333 = vsel %vm163, %v123, 0.0
    %v334 = vadd.f32 %v332, %v333
    %v335 = vsel %vm163, %v124, 0.0
    %v336 = vadd.f32 %v334, %v335
    %v337 = vsel %vm163, %v125, 0.0
    %v338 = vadd.f32 %v336, %v337
    %v339 = vsel %vm163, %v126, 0.0
    %v340 = vadd.f32 %v338, %v339
    %v341 = vsel %vm163, %v127, 0.0
    %v342 = vadd.f32 %v340, %v341
    %v343 = vsel %vm163, %v128, 0.0
    %v344 = vadd.f32 %v342, %v343
    %v345 = vsel %vm163, %v129, 0.0
    %v346 = vadd.f32 %v344, %v345
    %v347 = vsel %vm163, %v130, 0.0
    %v348 = vadd.f32 %v346, %v347
    %v349 = vsel %vm163, %v131, 0.0
    %v350 = vadd.f32 %v348, %v349
    %v351 = vsel %vm163, %v132, 0.0
    %v352 = vadd.f32 %v350, %v351
    %v353 = vsel %vm163, %v133, 0.0
    %v354 = vadd.f32 %v352, %v353
    %v355 = vsel %vm163, %v134, 0.0
    %v356 = vadd.f32 %v354, %v355
    %v357 = vsel %vm163, %v135, 0.0
    %v358 = vadd.f32 %v356, %v357
    %v359 = vsel %vm163, %v136, 0.0
    %v360 = vadd.f32 %v358, %v359
    %v361 = vsel %vm163, %v137, 0.0
    %v362 = vadd.f32 %v360, %v361
    %v363 = vsel %vm163, %v138, 0.0
    %v364 = vadd.f32 %v362, %v363
    %v365 = vsel %vm163, %v139, 0.0
    %v366 = vadd.f32 %v364, %v365
    %v367 = vsel %vm163, %v140, 0.0
    %v368 = vadd.f32 %v366, %v367
    %v369 = vsel %vm163, %v141, 0.0
    %v370 = vadd.f32 %v368, %v369
    %v371 = vsel %vm163, %v142, 0.0
    %v372 = vadd.f32 %v370, %v371
    %v373 = vsel %vm163, %v143, 0.0
    %v374 = vadd.f32 %v372, %v373
    %v375 = vsel %vm163, %v144, 0.0
    %v376 = vadd.f32 %v374, %v375
    %v377 = vsel %vm163, %v145, 0.0
    %v378 = vadd.f32 %v376, %v377
    %v379 = vsel %vm163, %v146, 0.0
    %v380 = vadd.f32 %v378, %v379
    %v381 = vsel %vm163, %v147, 0.0
    %v382 = vadd.f32 %v380, %v381
    %v383 = vsel %vm163, %v148, 0.0
    %v384 = vadd.f32 %v382, %v383
    %v385 = vsel %vm163, %v149, 0.0
    %v386 = vadd.f32 %v384, %v385
    %v387 = vsel %vm163, %v150, 0.0
    %v388 = vadd.f32 %v386, %v387
    %v389 = vsel %vm163, %v151, 0.0
    %v390 = vadd.f32 %v388, %v389
    %v391 = vsel %vm163, %v152, 0.0
    %v392 = vadd.f32 %v390, %v391
    %v393 = vsel %vm163, %v153, 0.0
    %v394 = vadd.f32 %v392, %v393
    %v395 = vsel %vm163, %v154, 0.0
    %v396 = vadd.f32 %v394, %v395
    %v397 = vsel %vm163, %v155, 0.0
    %v398 = vadd.f32 %v396, %v397
    %v399 = vsel %vm163, %v156, 0.0
    %v400 = vadd.f32 %v398, %v399
    %v401 = vsel %vm163, %v157, 0.0
    %v402 = vadd.f32 %v400, %v401
    %v403 = vsel %vm163, %v158, 0.0
    %v404 = vadd.f32 %v402, %v403
    %v405 = vsel %vm163, %v159, 0.0
    %v406 = vadd.f32 %v404, %v405
    %v407 = vsel %vm163, %v160, 0.0
    %v408 = vadd.f32 %v406, %v407
    %v409 = vsel %vm163, %v161, 0.0
    %v410 = vadd.f32 %v408, %v409
    %v411 = vsel %vm163, %v162, 0.0
    %v412 = vadd.f32 %v410, %v411
    %v413 = vrot.slane %v412, 4
    %v414 = vadd.f32 %v412, %v413
    %v415 = vrot.slane %v414, 2
    %v416 = vadd.f32 %v414, %v415
    %v417 = vrot.slane %v416, 1
    %v418 = vadd.f32 %v416, %v417
    %v419 = vrcp.pop 1000.0
    %v420 = vmul.f32 %v418, %v419
    %v421 = vld [vmem:[%s1] sm:$0xff]
    %v422 = vld [vmem:[%s1 + $0x8] sm:$0xff]
    %v423 = vld [vmem:[%s1 + $0x10] sm:$0xff]
    %v424 = vld [vmem:[%s1 + $0x18] sm:$0xff]
    %v425 = vld [vmem:[%s2] sm:$0x1]
    %v426 = vld [vmem:[%s3] sm:$0xff]
    %v427 = vld [vmem:[%s3 + $0x8] sm:$0xff]
    %v428 = vld [vmem:[%s3 + $0x10] sm:$0xff]
    %v429 = vld [vmem:[%s3 + $0x18] sm:$0xff]
    %v430 = vld [vmem:[%s4] sm:$0xff]
    %v431 = vld [vmem:[%s4 + $0x8] sm:$0xff]
    %v432 = vld [vmem:[%s4 + $0x10] sm:$0xff]
    %v433 = vld [vmem:[%s4 + $0x18] sm:$0xff]
    %v434 = vld [vmem:[%s5] sm:$0x1]
    %v435 = vld [vmem:[%s6] sm:$0xff]
    %v436 = vld [vmem:[%s6 + $0x8] sm:$0xff]
    %v437 = vld [vmem:[%s6 + $0x10] sm:$0xff]
    %v438 = vld [vmem:[%s6 + $0x18] sm:$0xff]
    %v439 = vld [vmem:[%s7] sm:$0x1]
    %v440 = vld [vmem:[%s8] sm:$0x1]
    %v441 = vld [vmem:[#allocation2] sm:$0x1]
    %v443 = vsel %vm163, %v420, 0
    %445 = vmatprep.subr.mxu0 0.0
    %446 = vmatpush1.msra.mxu0 %v421
    %447 = vmatprep.subr.mxu0 0.0
    %448 = vmatpush1.msra.mxu0 %v422
    %449 = vmatprep.subr.mxu0 0.0
    %450 = vmatpush1.msra.mxu0 %v423
    %451 = vmatprep.subr.mxu0 0.0
    %452 = vmatpush1.msra.mxu0 %v424
    %453 = vmatprep.subr.mxu0 0.0
    %454 = vmatpush1.msra.mxu0 0.0
    %455 = vmatprep.subr.mxu0 0.0
    %456 = vmatpush1.msra.mxu0 0.0
    %457 = vmatprep.subr.mxu0 0.0
    %458 = vmatpush1.msra.mxu0 0.0
    %459 = vmatprep.subr.mxu0 0.0
    %460 = vmatpush1.msra.mxu0 0.0
    %461 = vmatprep.subr.mxu0 0.0
    %462 = vmatpush1.msra.mxu0 0.0
    %463 = vmatprep.subr.mxu0 0.0
    %464 = vmatpush1.msra.mxu0 0.0
    %465 = vmatprep.subr.mxu0 0.0
    %466 = vmatpush1.msra.mxu0 0.0
    %467 = vmatprep.subr.mxu0 0.0
    %468 = vmatpush1.msra.mxu0 0.0
    %469 = vmatprep.subr.mxu0 0.0
    %470 = vmatpush1.msra.mxu0 0.0
    %471 = vmatprep.subr.mxu0 0.0
    %472 = vmatpush1.msra.mxu0 0.0
    %473 = vmatprep.subr.mxu0 0.0
    %474 = vmatpush1.msra.mxu0 0.0
    %475 = vmatprep.subr.mxu0 0.0
    %476 = vmatpush1.msra.mxu0 0.0
    %477 = vmatprep.subr.mxu0 0.0
    %478 = vmatpush1.msra.mxu0 0.0
    %479 = vmatprep.subr.mxu0 0.0
    %480 = vmatpush1.msra.mxu0 0.0
    %481 = vmatprep.subr.mxu0 0.0
    %482 = vmatpush1.msra.mxu0 0.0
    %483 = vmatprep.subr.mxu0 0.0
    %484 = vmatpush1.msra.mxu0 0.0
    %485 = vmatprep.subr.mxu0 0.0
    %486 = vmatpush1.msra.mxu0 0.0
    %487 = vmatprep.subr.mxu0 0.0
    %488 = vmatpush1.msra.mxu0 0.0
    %489 = vmatprep.subr.mxu0 0.0
    %490 = vmatpush1.msra.mxu0 0.0
    %491 = vmatprep.subr.mxu0 0.0
    %492 = vmatpush1.msra.mxu0 0.0
    %493 = vmatprep.subr.mxu0 0.0
    %494 = vmatpush1.msra.mxu0 0.0
    %495 = vmatprep.subr.mxu0 0.0
    %496 = vmatpush1.msra.mxu0 0.0
    %497 = vmatprep.subr.mxu0 0.0
    %498 = vmatpush1.msra.mxu0 0.0
    %499 = vmatprep.subr.mxu0 0.0
    %500 = vmatpush1.msra.mxu0 0.0
    %501 = vmatprep.subr.mxu0 0.0
    %502 = vmatpush1.msra.mxu0 0.0
    %503 = vmatprep.subr.mxu0 0.0
    %504 = vmatpush1.msra.mxu0 0.0
    %505 = vmatprep.subr.mxu0 0.0
    %506 = vmatpush1.msra.mxu0 0.0
    %507 = vmatprep.subr.mxu0 0.0
    %508 = vmatpush1.msra.mxu0 0.0
    %509 = vmatprep.mubr.f32.mxu0 0.0
    %510 = vmatmul.mubr.f32.gmra.mrb[0].mxu0 %v443
    %v511 = vpop.f32.mrb[0].mxu0
    %v512 = vadd.f32 %v425, %v511
    %v513 = vpop.f32.mrb[0].mxu0
    %514 = vdwg.mxu0
    %v516 = vsel %vm163, %v512, 0
    %518 = vmatprep.subr.mxu0 0.0
    %519 = vmatpush1.msra.mxu0 %v426
    %520 = vmatprep.subr.mxu0 0.0
    %521 = vmatpush1.msra.mxu0 %v427
    %522 = vmatprep.subr.mxu0 0.0
    %523 = vmatpush1.msra.mxu0 %v428
    %524 = vmatprep.subr.mxu0 0.0
    %525 = vmatpush1.msra.mxu0 %v429
    %526 = vmatprep.subr.mxu0 0.0
    %527 = vmatpush1.msra.mxu0 0.0
    %528 = vmatprep.subr.mxu0 0.0
    %529 = vmatpush1.msra.mxu0 0.0
    %530 = vmatprep.subr.mxu0 0.0
    %531 = vmatpush1.msra.mxu0 0.0
    %532 = vmatprep.subr.mxu0 0.0
    %533 = vmatpush1.msra.mxu0 0.0
    %534 = vmatprep.subr.mxu0 0.0
    %535 = vmatpush1.msra.mxu0 0.0
    %536 = vmatprep.subr.mxu0 0.0
    %537 = vmatpush1.msra.mxu0 0.0
    %538 = vmatprep.subr.mxu0 0.0
    %539 = vmatpush1.msra.mxu0 0.0
    %540 = vmatprep.subr.mxu0 0.0
    %541 = vmatpush1.msra.mxu0 0.0
    %542 = vmatprep.subr.mxu0 0.0
    %543 = vmatpush1.msra.mxu0 0.0
    %544 = vmatprep.subr.mxu0 0.0
    %545 = vmatpush1.msra.mxu0 0.0
    %546 = vmatprep.subr.mxu0 0.0
    %547 = vmatpush1.msra.mxu0 0.0
    %548 = vmatprep.subr.mxu0 0.0
    %549 = vmatpush1.msra.mxu0 0.0
    %550 = vmatprep.subr.mxu0 0.0
    %551 = vmatpush1.msra.mxu0 0.0
    %552 = vmatprep.subr.mxu0 0.0
    %553 = vmatpush1.msra.mxu0 0.0
    %554 = vmatprep.subr.mxu0 0.0
    %555 = vmatpush1.msra.mxu0 0.0
    %556 = vmatprep.subr.mxu0 0.0
    %557 = vmatpush1.msra.mxu0 0.0
    %558 = vmatprep.subr.mxu0 0.0
    %559 = vmatpush1.msra.mxu0 0.0
    %560 = vmatprep.subr.mxu0 0.0
    %561 = vmatpush1.msra.mxu0 0.0
    %562 = vmatprep.subr.mxu0 0.0
    %563 = vmatpush1.msra.mxu0 0.0
    %564 = vmatprep.subr.mxu0 0.0
    %565 = vmatpush1.msra.mxu0 0.0
    %566 = vmatprep.subr.mxu0 0.0
    %567 = vmatpush1.msra.mxu0 0.0
    %568 = vmatprep.subr.mxu0 0.0
    %569 = vmatpush1.msra.mxu0 0.0
    %570 = vmatprep.subr.mxu0 0.0
    %571 = vmatpush1.msra.mxu0 0.0
    %572 = vmatprep.subr.mxu0 0.0
    %573 = vmatpush1.msra.mxu0 0.0
    %574 = vmatprep.subr.mxu0 0.0
    %575 = vmatpush1.msra.mxu0 0.0
    %576 = vmatprep.subr.mxu0 0.0
    %577 = vmatpush1.msra.mxu0 0.0
    %578 = vmatprep.subr.mxu0 0.0
    %579 = vmatpush1.msra.mxu0 0.0
    %580 = vmatprep.subr.mxu0 0.0
    %581 = vmatpush1.msra.mxu0 0.0
    %582 = vmatprep.mubr.f32.mxu0 0.0
    %583 = vmatmul.mubr.f32.gmra.mrb[0].mxu0 %v516
    %v584 = vpop.f32.mrb[0].mxu0
    %v585 = vadd.f32 0.0, %v584
    %v586 = vpop.f32.mrb[0].mxu0
    %587 = vdwg.mxu0
    %v589 = vlaneseq
    %v590 = vshrl.u32 %v589, 7
    %v591 = vsub.s32 0, %v590
    %v592 = vrot.slane %v440, %v591
    %593 = vrot.lane.b32.xlu0 %v592, 64
    %v594 = vpop.permute.xlu0 %593
    %v596 = vmul.f32 %v585, %v594
    %598 = vrot.lane.b32.xlu0 %v596, 64
    %v599 = vpop.permute.xlu0 %598
    %vm600 = vcmask 130048
    %v601 = vsel %vm600, %v599, 0
    %v604 = vsel %vm600, %v435, 0
    %v607 = vsel %vm600, %v436, 0
    %v610 = vsel %vm600, %v437, 0
    %v613 = vsel %vm600, %v438, 0
    %615 = vmatprep.subr.mxu0 0.0
    %616 = vmatpush1.xpose.msra.mxu0 %v604
    %617 = vmatprep.subr.mxu0 0.0
    %618 = vmatpush1.xpose.msra.mxu0 %v607
    %619 = vmatprep.subr.mxu0 0.0
    %620 = vmatpush1.xpose.msra.mxu0 %v610
    %621 = vmatprep.subr.mxu0 0.0
    %622 = vmatpush1.xpose.msra.mxu0 %v613
    %623 = vmatprep.subr.mxu0 0.0
    %624 = vmatpush1.xpose.msra.mxu0 0.0
    %625 = vmatprep.subr.mxu0 0.0
    %626 = vmatpush1.xpose.msra.mxu0 0.0
    %627 = vmatprep.subr.mxu0 0.0
    %628 = vmatpush1.xpose.msra.mxu0 0.0
    %629 = vmatprep.subr.mxu0 0.0
    %630 = vmatpush1.xpose.msra.mxu0 0.0
    %631 = vmatprep.subr.mxu0 0.0
    %632 = vmatpush1.xpose.msra.mxu0 0.0
    %633 = vmatprep.subr.mxu0 0.0
    %634 = vmatpush1.xpose.msra.mxu0 0.0
    %635 = vmatprep.subr.mxu0 0.0
    %636 = vmatpush1.xpose.msra.mxu0 0.0
    %637 = vmatprep.subr.mxu0 0.0
    %638 = vmatpush1.xpose.msra.mxu0 0.0
    %639 = vmatprep.subr.mxu0 0.0
    %640 = vmatpush1.xpose.msra.mxu0 0.0
    %641 = vmatprep.subr.mxu0 0.0
    %642 = vmatpush1.xpose.msra.mxu0 0.0
    %643 = vmatprep.subr.mxu0 0.0
    %644 = vmatpush1.xpose.msra.mxu0 0.0
    %645 = vmatprep.subr.mxu0 0.0
    %646 = vmatpush1.xpose.msra.mxu0 0.0
    %647 = vmatprep.subr.mxu0 0.0
    %648 = vmatpush1.xpose.msra.mxu0 0.0
    %649 = vmatprep.subr.mxu0 0.0
    %650 = vmatpush1.xpose.msra.mxu0 0.0
    %651 = vmatprep.subr.mxu0 0.0
    %652 = vmatpush1.xpose.msra.mxu0 0.0
    %653 = vmatprep.subr.mxu0 0.0
    %654 = vmatpush1.xpose.msra.mxu0 0.0
    %655 = vmatprep.subr.mxu0 0.0
    %656 = vmatpush1.xpose.msra.mxu0 0.0
    %657 = vmatprep.subr.mxu0 0.0
    %658 = vmatpush1.xpose.msra.mxu0 0.0
    %659 = vmatprep.subr.mxu0 0.0
    %660 = vmatpush1.xpose.msra.mxu0 0.0
    %661 = vmatprep.subr.mxu0 0.0
    %662 = vmatpush1.xpose.msra.mxu0 0.0
    %663 = vmatprep.subr.mxu0 0.0
    %664 = vmatpush1.xpose.msra.mxu0 0.0
    %665 = vmatprep.subr.mxu0 0.0
    %666 = vmatpush1.xpose.msra.mxu0 0.0
    %667 = vmatprep.subr.mxu0 0.0
    %668 = vmatpush1.xpose.msra.mxu0 0.0
    %669 = vmatprep.subr.mxu0 0.0
    %670 = vmatpush1.xpose.msra.mxu0 0.0
    %671 = vmatprep.subr.mxu0 0.0
    %672 = vmatpush1.xpose.msra.mxu0 0.0
    %673 = vmatprep.subr.mxu0 0.0
    %674 = vmatpush1.xpose.msra.mxu0 0.0
    %675 = vmatprep.subr.mxu0 0.0
    %676 = vmatpush1.xpose.msra.mxu0 0.0
    %677 = vmatprep.subr.mxu0 0.0
    %678 = vmatpush1.xpose.msra.mxu0 0.0
    %679 = vmatprep.mubr.f32.mxu0 0.0
    %680 = vmatmul.mubr.f32.gmra.mrb[0].mxu0 %v601
    %v681 = vpop.f32.mrb[0].mxu0
    %v682 = vadd.f32 0.0, %v681
    %v683 = vpop.f32.mrb[0].mxu0
    %684 = vdwg.mxu0
    %v686 = vunpack.c.l.s4 1966171168
    %v687 = vunpack.c.0.s8 %v686
    %v688 = vlaneseq
    %v689 = vshrl.u32 %v688, 7
    %v690 = vsub.s32 %v687, %v689
    %v691 = vrot.slane %v596, %v690
    %v693 = vunpack.c.l.s4 1966171168
    %v694 = vunpack.c.0.s8 %v693
    %v695 = vlaneseq
    %v696 = vshrl.u32 %v695, 7
    %v697 = vsub.s32 %v694, %v696
    %v698 = vrot.slane %v691, %v697
    %699 = vrot.lane.b32.xlu0 %v698, 64
    %v700 = vpop.permute.xlu0 %699
    %v702 = vmul.f32 %v439, %v700
    %vm703 = vcmask 122880
    %v704 = vsel %vm703, %v702, 0.0
    %705 = vadd.xlane.f32.xlu0 %v704
    %v706 = vpop.xlane.xlu0 %705
    %707 = vrot.lane.b32.xlu0 %v592, 80
    %v708 = vpop.permute.xlu0 %707
    %v710 = vmul.f32 %v585, %v708
    %712 = vrot.lane.b32.xlu0 %v710, 48
    %v713 = vpop.permute.xlu0 %712
    %v715 = vsel %vm703, %v713, 0.0
    %716 = vadd.xlane.f32.xlu0 %v715
    %v717 = vpop.xlane.xlu0 %716
    %v718 = vadd.f32 %v706, %v717
    %v719 = vadd.f32 %v718, %v441
    %v720 = vmul.f32 %v585, %v682
    %v722 = vsel %vm163, %v720, 0
    %v725 = vsel %vm163, %v430, 0
    %v728 = vsel %vm163, %v431, 0
    %v731 = vsel %vm163, %v432, 0
    %v734 = vsel %vm163, %v433, 0
    %736 = vmatprep.subr.mxu0 0.0
    %737 = vmatpush1.xpose.msra.mxu0 %v725
    %738 = vmatprep.subr.mxu0 0.0
    %739 = vmatpush1.xpose.msra.mxu0 %v728
    %740 = vmatprep.subr.mxu0 0.0
    %741 = vmatpush1.xpose.msra.mxu0 %v731
    %742 = vmatprep.subr.mxu0 0.0
    %743 = vmatpush1.xpose.msra.mxu0 %v734
    %744 = vmatprep.subr.mxu0 0.0
    %745 = vmatpush1.xpose.msra.mxu0 0.0
    %746 = vmatprep.subr.mxu0 0.0
    %747 = vmatpush1.xpose.msra.mxu0 0.0
    %748 = vmatprep.subr.mxu0 0.0
    %749 = vmatpush1.xpose.msra.mxu0 0.0
    %750 = vmatprep.subr.mxu0 0.0
    %751 = vmatpush1.xpose.msra.mxu0 0.0
    %752 = vmatprep.subr.mxu0 0.0
    %753 = vmatpush1.xpose.msra.mxu0 0.0
    %754 = vmatprep.subr.mxu0 0.0
    %755 = vmatpush1.xpose.msra.mxu0 0.0
    %756 = vmatprep.subr.mxu0 0.0
    %757 = vmatpush1.xpose.msra.mxu0 0.0
    %758 = vmatprep.subr.mxu0 0.0
    %759 = vmatpush1.xpose.msra.mxu0 0.0
    %760 = vmatprep.subr.mxu0 0.0
    %761 = vmatpush1.xpose.msra.mxu0 0.0
    %762 = vmatprep.subr.mxu0 0.0
    %763 = vmatpush1.xpose.msra.mxu0 0.0
    %764 = vmatprep.subr.mxu0 0.0
    %765 = vmatpush1.xpose.msra.mxu0 0.0
    %766 = vmatprep.subr.mxu0 0.0
    %767 = vmatpush1.xpose.msra.mxu0 0.0
    %768 = vmatprep.subr.mxu0 0.0
    %769 = vmatpush1.xpose.msra.mxu0 0.0
    %770 = vmatprep.subr.mxu0 0.0
    %771 = vmatpush1.xpose.msra.mxu0 0.0
    %772 = vmatprep.subr.mxu0 0.0
    %773 = vmatpush1.xpose.msra.mxu0 0.0
    %774 = vmatprep.subr.mxu0 0.0
    %775 = vmatpush1.xpose.msra.mxu0 0.0
    %776 = vmatprep.subr.mxu0 0.0
    %777 = vmatpush1.xpose.msra.mxu0 0.0
    %778 = vmatprep.subr.mxu0 0.0
    %779 = vmatpush1.xpose.msra.mxu0 0.0
    %780 = vmatprep.subr.mxu0 0.0
    %781 = vmatpush1.xpose.msra.mxu0 0.0
    %782 = vmatprep.subr.mxu0 0.0
    %783 = vmatpush1.xpose.msra.mxu0 0.0
    %784 = vmatprep.subr.mxu0 0.0
    %785 = vmatpush1.xpose.msra.mxu0 0.0
    %786 = vmatprep.subr.mxu0 0.0
    %787 = vmatpush1.xpose.msra.mxu0 0.0
    %788 = vmatprep.subr.mxu0 0.0
    %789 = vmatpush1.xpose.msra.mxu0 0.0
    %790 = vmatprep.subr.mxu0 0.0
    %791 = vmatpush1.xpose.msra.mxu0 0.0
    %792 = vmatprep.subr.mxu0 0.0
    %793 = vmatpush1.xpose.msra.mxu0 0.0
    %794 = vmatprep.subr.mxu0 0.0
    %795 = vmatpush1.xpose.msra.mxu0 0.0
    %796 = vmatprep.subr.mxu0 0.0
    %797 = vmatpush1.xpose.msra.mxu0 0.0
    %798 = vmatprep.subr.mxu0 0.0
    %799 = vmatpush1.xpose.msra.mxu0 0.0
    %800 = vmatprep.mubr.f32.mxu0 0.0
    %801 = vmatmul.mubr.f32.gmra.mrb[0].mxu0 %v722
    %v802 = vpop.f32.mrb[0].mxu0
    %v803 = vadd.f32 0.0, %v802
    %v804 = vpop.f32.mrb[0].mxu0
    %805 = vdwg.mxu0
    %v806 = vmul.f32 %v434, %v720
    %vm807 = vcmask 253952
    %v808 = vsel %vm807, %v806, 0.0
    %809 = vadd.xlane.f32.xlu0 %v808
    %v810 = vpop.xlane.xlu0 %809
    %812 = vrot.lane.b32.xlu0 %v682, 32
    %v813 = vpop.permute.xlu0 %812
    %v815 = vmul.f32 %v585, %v813
    %817 = vrot.lane.b32.xlu0 %v815, 96
    %v818 = vpop.permute.xlu0 %817
    %v820 = vsel %vm807, %v818, 0.0
    %821 = vadd.xlane.f32.xlu0 %v820
    %v822 = vpop.xlane.xlu0 %821
    %v823 = vadd.f32 %v810, %v822
    %v824 = vadd.f32 %v823, %v719
    %826 = vset.pattern.permute.xlu0 0
    %827 = vperm.xlu0 %826, %v824
    %v828 = vpop.permute.xlu0 %827
    %v831 = vsel %vm163, %v803, 0
    %v834 = vsel %vm163, %v38, 0
    %v837 = vsel %vm163, %v39, 0
    %v840 = vsel %vm163, %v40, 0
    %v843 = vsel %vm163, %v41, 0
    %v846 = vsel %vm163, %v42, 0
    %v849 = vsel %vm163, %v43, 0
    %v852 = vsel %vm163, %v44, 0
    %v855 = vsel %vm163, %v45, 0
    %v858 = vsel %vm163, %v46, 0
    %v861 = vsel %vm163, %v47, 0
    %v864 = vsel %vm163, %v48, 0
    %v867 = vsel %vm163, %v49, 0
    %v870 = vsel %vm163, %v50, 0
    %v873 = vsel %vm163, %v51, 0
    %v876 = vsel %vm163, %v52, 0
    %v879 = vsel %vm163, %v53, 0
    %v882 = vsel %vm163, %v54, 0
    %v885 = vsel %vm163, %v55, 0
    %v888 = vsel %vm163, %v56, 0
    %v891 = vsel %vm163, %v57, 0
    %v894 = vsel %vm163, %v58, 0
    %v897 = vsel %vm163, %v59, 0
    %v900 = vsel %vm163, %v60, 0
    %v903 = vsel %vm163, %v61, 0
    %v906 = vsel %vm163, %v62, 0
    %v909 = vsel %vm163, %v63, 0
    %v912 = vsel %vm163, %v64, 0
    %v915 = vsel %vm163, %v65, 0
    %v918 = vsel %vm163, %v66, 0
    %v921 = vsel %vm163, %v67, 0
    %v924 = vsel %vm163, %v68, 0
    %v927 = vsel %vm163, %v69, 0
    %v930 = vsel %vm163, %v70, 0
    %v933 = vsel %vm163, %v71, 0
    %v936 = vsel %vm163, %v72, 0
    %v939 = vsel %vm163, %v73, 0
    %v942 = vsel %vm163, %v74, 0
    %v945 = vsel %vm163, %v75, 0
    %v948 = vsel %vm163, %v76, 0
    %v951 = vsel %vm163, %v77, 0
    %v954 = vsel %vm163, %v78, 0
    %v957 = vsel %vm163, %v79, 0
    %v960 = vsel %vm163, %v80, 0
    %v963 = vsel %vm163, %v81, 0
    %v966 = vsel %vm163, %v82, 0
    %v969 = vsel %vm163, %v83, 0
    %v972 = vsel %vm163, %v84, 0
    %v975 = vsel %vm163, %v85, 0
    %v978 = vsel %vm163, %v86, 0
    %v981 = vsel %vm163, %v87, 0
    %v984 = vsel %vm163, %v88, 0
    %v987 = vsel %vm163, %v89, 0
    %v990 = vsel %vm163, %v90, 0
    %v993 = vsel %vm163, %v91, 0
    %v996 = vsel %vm163, %v92, 0
    %v999 = vsel %vm163, %v93, 0
    %v1002 = vsel %vm163, %v94, 0
    %v1005 = vsel %vm163, %v95, 0
    %v1008 = vsel %vm163, %v96, 0
    %v1011 = vsel %vm163, %v97, 0
    %v1014 = vsel %vm163, %v98, 0
    %v1017 = vsel %vm163, %v99, 0
    %v1020 = vsel %vm163, %v100, 0
    %v1023 = vsel %vm163, %v101, 0
    %v1026 = vsel %vm163, %v102, 0
    %v1029 = vsel %vm163, %v103, 0
    %v1032 = vsel %vm163, %v104, 0
    %v1035 = vsel %vm163, %v105, 0
    %v1038 = vsel %vm163, %v106, 0
    %v1041 = vsel %vm163, %v107, 0
    %v1044 = vsel %vm163, %v108, 0
    %v1047 = vsel %vm163, %v109, 0
    %v1050 = vsel %vm163, %v110, 0
    %v1053 = vsel %vm163, %v111, 0
    %v1056 = vsel %vm163, %v112, 0
    %v1059 = vsel %vm163, %v113, 0
    %v1062 = vsel %vm163, %v114, 0
    %v1065 = vsel %vm163, %v115, 0
    %v1068 = vsel %vm163, %v116, 0
    %v1071 = vsel %vm163, %v117, 0
    %v1074 = vsel %vm163, %v118, 0
    %v1077 = vsel %vm163, %v119, 0
    %v1080 = vsel %vm163, %v120, 0
    %v1083 = vsel %vm163, %v121, 0
    %v1086 = vsel %vm163, %v122, 0
    %v1089 = vsel %vm163, %v123, 0
    %v1092 = vsel %vm163, %v124, 0
    %v1095 = vsel %vm163, %v125, 0
    %v1098 = vsel %vm163, %v126, 0
    %v1101 = vsel %vm163, %v127, 0
    %v1104 = vsel %vm163, %v128, 0
    %v1107 = vsel %vm163, %v129, 0
    %v1110 = vsel %vm163, %v130, 0
    %v1113 = vsel %vm163, %v131, 0
    %v1116 = vsel %vm163, %v132, 0
    %v1119 = vsel %vm163, %v133, 0
    %v1122 = vsel %vm163, %v134, 0
    %v1125 = vsel %vm163, %v135, 0
    %v1128 = vsel %vm163, %v136, 0
    %v1131 = vsel %vm163, %v137, 0
    %v1134 = vsel %vm163, %v138, 0
    %v1137 = vsel %vm163, %v139, 0
    %v1140 = vsel %vm163, %v140, 0
    %v1143 = vsel %vm163, %v141, 0
    %v1146 = vsel %vm163, %v142, 0
    %v1149 = vsel %vm163, %v143, 0
    %v1152 = vsel %vm163, %v144, 0
    %v1155 = vsel %vm163, %v145, 0
    %v1158 = vsel %vm163, %v146, 0
    %v1161 = vsel %vm163, %v147, 0
    %v1164 = vsel %vm163, %v148, 0
    %v1167 = vsel %vm163, %v149, 0
    %v1170 = vsel %vm163, %v150, 0
    %v1173 = vsel %vm163, %v151, 0
    %v1176 = vsel %vm163, %v152, 0
    %v1179 = vsel %vm163, %v153, 0
    %v1182 = vsel %vm163, %v154, 0
    %v1185 = vsel %vm163, %v155, 0
    %v1188 = vsel %vm163, %v156, 0
    %v1191 = vsel %vm163, %v157, 0
    %v1194 = vsel %vm163, %v158, 0
    %v1197 = vsel %vm163, %v159, 0
    %v1200 = vsel %vm163, %v160, 0
    %v1203 = vsel %vm163, %v161, 0
    %v1206 = vsel %vm163, %v162, 0
    %1208 = vmatprep.subr.mxu0 0.0
    %1209 = vmatpush1.xpose.msra.mxu0 %v834
    %1210 = vmatprep.subr.mxu0 0.0
    %1211 = vmatpush1.xpose.msra.mxu0 %v837
    %1212 = vmatprep.subr.mxu0 0.0
    %1213 = vmatpush1.xpose.msra.mxu0 %v840
    %1214 = vmatprep.subr.mxu0 0.0
    %1215 = vmatpush1.xpose.msra.mxu0 %v843
    %1216 = vmatprep.subr.mxu0 0.0
    %1217 = vmatpush1.xpose.msra.mxu0 %v846
    %1218 = vmatprep.subr.mxu0 0.0
    %1219 = vmatpush1.xpose.msra.mxu0 %v849
    %1220 = vmatprep.subr.mxu0 0.0
    %1221 = vmatpush1.xpose.msra.mxu0 %v852
    %1222 = vmatprep.subr.mxu0 0.0
    %1223 = vmatpush1.xpose.msra.mxu0 %v855
    %1224 = vmatprep.subr.mxu0 0.0
    %1225 = vmatpush1.xpose.msra.mxu0 %v858
    %1226 = vmatprep.subr.mxu0 0.0
    %1227 = vmatpush1.xpose.msra.mxu0 %v861
    %1228 = vmatprep.subr.mxu0 0.0
    %1229 = vmatpush1.xpose.msra.mxu0 %v864
    %1230 = vmatprep.subr.mxu0 0.0
    %1231 = vmatpush1.xpose.msra.mxu0 %v867
    %1232 = vmatprep.subr.mxu0 0.0
    %1233 = vmatpush1.xpose.msra.mxu0 %v870
    %1234 = vmatprep.subr.mxu0 0.0
    %1235 = vmatpush1.xpose.msra.mxu0 %v873
    %1236 = vmatprep.subr.mxu0 0.0
    %1237 = vmatpush1.xpose.msra.mxu0 %v876
    %1238 = vmatprep.subr.mxu0 0.0
    %1239 = vmatpush1.xpose.msra.mxu0 %v879
    %1240 = vmatprep.subr.mxu0 0.0
    %1241 = vmatpush1.xpose.msra.mxu0 %v882
    %1242 = vmatprep.subr.mxu0 0.0
    %1243 = vmatpush1.xpose.msra.mxu0 %v885
    %1244 = vmatprep.subr.mxu0 0.0
    %1245 = vmatpush1.xpose.msra.mxu0 %v888
    %1246 = vmatprep.subr.mxu0 0.0
    %1247 = vmatpush1.xpose.msra.mxu0 %v891
    %1248 = vmatprep.subr.mxu0 0.0
    %1249 = vmatpush1.xpose.msra.mxu0 %v894
    %1250 = vmatprep.subr.mxu0 0.0
    %1251 = vmatpush1.xpose.msra.mxu0 %v897
    %1252 = vmatprep.subr.mxu0 0.0
    %1253 = vmatpush1.xpose.msra.mxu0 %v900
    %1254 = vmatprep.subr.mxu0 0.0
    %1255 = vmatpush1.xpose.msra.mxu0 %v903
    %1256 = vmatprep.subr.mxu0 0.0
    %1257 = vmatpush1.xpose.msra.mxu0 %v906
    %1258 = vmatprep.subr.mxu0 0.0
    %1259 = vmatpush1.xpose.msra.mxu0 %v909
    %1260 = vmatprep.subr.mxu0 0.0
    %1261 = vmatpush1.xpose.msra.mxu0 %v912
    %1262 = vmatprep.subr.mxu0 0.0
    %1263 = vmatpush1.xpose.msra.mxu0 %v915
    %1264 = vmatprep.subr.mxu0 0.0
    %1265 = vmatpush1.xpose.msra.mxu0 %v918
    %1266 = vmatprep.subr.mxu0 0.0
    %1267 = vmatpush1.xpose.msra.mxu0 %v921
    %1268 = vmatprep.subr.mxu0 0.0
    %1269 = vmatpush1.xpose.msra.mxu0 %v924
    %1270 = vmatprep.subr.mxu0 0.0
    %1271 = vmatpush1.xpose.msra.mxu0 %v927
    %1272 = vmatprep.mubr.f32.mxu0 0.0
    %1273 = vmatmul.mubr.f32.gmra.mrb[0].mxu0 %v831
    %v1274 = vpop.f32.mrb[0].mxu0
    %v1275 = vadd.f32 %v828, %v1274
    %v1276 = vpop.f32.mrb[0].mxu0
    %v1277 = vadd.f32 %v828, %v1276
    %1278 = vdwg.mxu0
    %1279 = vmatprep.subr.mxu0 0.0
    %1280 = vmatpush1.xpose.msra.mxu0 %v930
    %1281 = vmatprep.subr.mxu0 0.0
    %1282 = vmatpush1.xpose.msra.mxu0 %v933
    %1283 = vmatprep.subr.mxu0 0.0
    %1284 = vmatpush1.xpose.msra.mxu0 %v936
    %1285 = vmatprep.subr.mxu0 0.0
    %1286 = vmatpush1.xpose.msra.mxu0 %v939
    %1287 = vmatprep.subr.mxu0 0.0
    %1288 = vmatpush1.xpose.msra.mxu0 %v942
    %1289 = vmatprep.subr.mxu0 0.0
    %1290 = vmatpush1.xpose.msra.mxu0 %v945
    %1291 = vmatprep.subr.mxu0 0.0
    %1292 = vmatpush1.xpose.msra.mxu0 %v948
    %1293 = vmatprep.subr.mxu0 0.0
    %1294 = vmatpush1.xpose.msra.mxu0 %v951
    %1295 = vmatprep.subr.mxu0 0.0
    %1296 = vmatpush1.xpose.msra.mxu0 %v954
    %1297 = vmatprep.subr.mxu0 0.0
    %1298 = vmatpush1.xpose.msra.mxu0 %v957
    %1299 = vmatprep.subr.mxu0 0.0
    %1300 = vmatpush1.xpose.msra.mxu0 %v960
    %1301 = vmatprep.subr.mxu0 0.0
    %1302 = vmatpush1.xpose.msra.mxu0 %v963
    %1303 = vmatprep.subr.mxu0 0.0
    %1304 = vmatpush1.xpose.msra.mxu0 %v966
    %1305 = vmatprep.subr.mxu0 0.0
    %1306 = vmatpush1.xpose.msra.mxu0 %v969
    %1307 = vmatprep.subr.mxu0 0.0
    %1308 = vmatpush1.xpose.msra.mxu0 %v972
    %1309 = vmatprep.subr.mxu0 0.0
    %1310 = vmatpush1.xpose.msra.mxu0 %v975
    %1311 = vmatprep.subr.mxu0 0.0
    %1312 = vmatpush1.xpose.msra.mxu0 %v978
    %1313 = vmatprep.subr.mxu0 0.0
    %1314 = vmatpush1.xpose.msra.mxu0 %v981
    %1315 = vmatprep.subr.mxu0 0.0
    %1316 = vmatpush1.xpose.msra.mxu0 %v984
    %1317 = vmatprep.subr.mxu0 0.0
    %1318 = vmatpush1.xpose.msra.mxu0 %v987
    %1319 = vmatprep.subr.mxu0 0.0
    %1320 = vmatpush1.xpose.msra.mxu0 %v990
    %1321 = vmatprep.subr.mxu0 0.0
    %1322 = vmatpush1.xpose.msra.mxu0 %v993
    %1323 = vmatprep.subr.mxu0 0.0
    %1324 = vmatpush1.xpose.msra.mxu0 %v996
    %1325 = vmatprep.subr.mxu0 0.0
    %1326 = vmatpush1.xpose.msra.mxu0 %v999
    %1327 = vmatprep.subr.mxu0 0.0
    %1328 = vmatpush1.xpose.msra.mxu0 %v1002
    %1329 = vmatprep.subr.mxu0 0.0
    %1330 = vmatpush1.xpose.msra.mxu0 %v1005
    %1331 = vmatprep.subr.mxu0 0.0
    %1332 = vmatpush1.xpose.msra.mxu0 %v1008
    %1333 = vmatprep.subr.mxu0 0.0
    %1334 = vmatpush1.xpose.msra.mxu0 %v1011
    %1335 = vmatprep.subr.mxu0 0.0
    %1336 = vmatpush1.xpose.msra.mxu0 %v1014
    %1337 = vmatprep.subr.mxu0 0.0
    %1338 = vmatpush1.xpose.msra.mxu0 %v1017
    %1339 = vmatprep.subr.mxu0 0.0
    %1340 = vmatpush1.xpose.msra.mxu0 %v1020
    %1341 = vmatprep.subr.mxu0 0.0
    %1342 = vmatpush1.xpose.msra.mxu0 %v1023
    %1343 = vmatprep.mubr.f32.mxu0 0.0
    %1344 = vmatmul.mubr.f32.gmra.mrb[0].mxu0 %v831
    %v1345 = vpop.f32.mrb[0].mxu0
    %v1346 = vadd.f32 %v828, %v1345
    %v1347 = vpop.f32.mrb[0].mxu0
    %v1348 = vadd.f32 %v828, %v1347
    %1349 = vdwg.mxu0
    %1350 = vmatprep.subr.mxu0 0.0
    %1351 = vmatpush1.xpose.msra.mxu0 %v1026
    %1352 = vmatprep.subr.mxu0 0.0
    %1353 = vmatpush1.xpose.msra.mxu0 %v1029
    %1354 = vmatprep.subr.mxu0 0.0
    %1355 = vmatpush1.xpose.msra.mxu0 %v1032
    %1356 = vmatprep.subr.mxu0 0.0
    %1357 = vmatpush1.xpose.msra.mxu0 %v1035
    %1358 = vmatprep.subr.mxu0 0.0
    %1359 = vmatpush1.xpose.msra.mxu0 %v1038
    %1360 = vmatprep.subr.mxu0 0.0
    %1361 = vmatpush1.xpose.msra.mxu0 %v1041
    %1362 = vmatprep.subr.mxu0 0.0
    %1363 = vmatpush1.xpose.msra.mxu0 %v1044
    %1364 = vmatprep.subr.mxu0 0.0
    %1365 = vmatpush1.xpose.msra.mxu0 %v1047
    %1366 = vmatprep.subr.mxu0 0.0
    %1367 = vmatpush1.xpose.msra.mxu0 %v1050
    %1368 = vmatprep.subr.mxu0 0.0
    %1369 = vmatpush1.xpose.msra.mxu0 %v1053
    %1370 = vmatprep.subr.mxu0 0.0
    %1371 = vmatpush1.xpose.msra.mxu0 %v1056
    %1372 = vmatprep.subr.mxu0 0.0
    %1373 = vmatpush1.xpose.msra.mxu0 %v1059
    %1374 = vmatprep.subr.mxu0 0.0
    %1375 = vmatpush1.xpose.msra.mxu0 %v1062
    %1376 = vmatprep.subr.mxu0 0.0
    %1377 = vmatpush1.xpose.msra.mxu0 %v1065
    %1378 = vmatprep.subr.mxu0 0.0
    %1379 = vmatpush1.xpose.msra.mxu0 %v1068
    %1380 = vmatprep.subr.mxu0 0.0
    %1381 = vmatpush1.xpose.msra.mxu0 %v1071
    %1382 = vmatprep.subr.mxu0 0.0
    %1383 = vmatpush1.xpose.msra.mxu0 %v1074
    %1384 = vmatprep.subr.mxu0 0.0
    %1385 = vmatpush1.xpose.msra.mxu0 %v1077
    %1386 = vmatprep.subr.mxu0 0.0
    %1387 = vmatpush1.xpose.msra.mxu0 %v1080
    %1388 = vmatprep.subr.mxu0 0.0
    %1389 = vmatpush1.xpose.msra.mxu0 %v1083
    %1390 = vmatprep.subr.mxu0 0.0
    %1391 = vmatpush1.xpose.msra.mxu0 %v1086
    %1392 = vmatprep.subr.mxu0 0.0
    %1393 = vmatpush1.xpose.msra.mxu0 %v1089
    %1394 = vmatprep.subr.mxu0 0.0
    %1395 = vmatpush1.xpose.msra.mxu0 %v1092
    %1396 = vmatprep.subr.mxu0 0.0
    %1397 = vmatpush1.xpose.msra.mxu0 %v1095
    %1398 = vmatprep.subr.mxu0 0.0
    %1399 = vmatpush1.xpose.msra.mxu0 %v1098
    %1400 = vmatprep.subr.mxu0 0.0
    %1401 = vmatpush1.xpose.msra.mxu0 %v1101
    %1402 = vmatprep.subr.mxu0 0.0
    %1403 = vmatpush1.xpose.msra.mxu0 %v1104
    %1404 = vmatprep.subr.mxu0 0.0
    %1405 = vmatpush1.xpose.msra.mxu0 %v1107
    %1406 = vmatprep.subr.mxu0 0.0
    %1407 = vmatpush1.xpose.msra.mxu0 %v1110
    %1408 = vmatprep.subr.mxu0 0.0
    %1409 = vmatpush1.xpose.msra.mxu0 %v1113
    %1410 = vmatprep.subr.mxu0 0.0
    %1411 = vmatpush1.xpose.msra.mxu0 %v1116
    %1412 = vmatprep.subr.mxu0 0.0
    %1413 = vmatpush1.xpose.msra.mxu0 %v1119
    %1414 = vmatprep.mubr.f32.mxu0 0.0
    %1415 = vmatmul.mubr.f32.gmra.mrb[0].mxu0 %v831
    %v1416 = vpop.f32.mrb[0].mxu0
    %v1417 = vadd.f32 %v828, %v1416
    %v1418 = vpop.f32.mrb[0].mxu0
    %v1419 = vadd.f32 %v828, %v1418
    %1420 = vdwg.mxu0
    %1421 = vmatprep.subr.mxu0 0.0
    %1422 = vmatpush1.xpose.msra.mxu0 %v1122
    %1423 = vmatprep.subr.mxu0 0.0
    %1424 = vmatpush1.xpose.msra.mxu0 %v1125
    %1425 = vmatprep.subr.mxu0 0.0
    %1426 = vmatpush1.xpose.msra.mxu0 %v1128
    %1427 = vmatprep.subr.mxu0 0.0
    %1428 = vmatpush1.xpose.msra.mxu0 %v1131
    %1429 = vmatprep.subr.mxu0 0.0
    %1430 = vmatpush1.xpose.msra.mxu0 %v1134
    %1431 = vmatprep.subr.mxu0 0.0
    %1432 = vmatpush1.xpose.msra.mxu0 %v1137
    %1433 = vmatprep.subr.mxu0 0.0
    %1434 = vmatpush1.xpose.msra.mxu0 %v1140
    %1435 = vmatprep.subr.mxu0 0.0
    %1436 = vmatpush1.xpose.msra.mxu0 %v1143
    %1437 = vmatprep.subr.mxu0 0.0
    %1438 = vmatpush1.xpose.msra.mxu0 %v1146
    %1439 = vmatprep.subr.mxu0 0.0
    %1440 = vmatpush1.xpose.msra.mxu0 %v1149
    %1441 = vmatprep.subr.mxu0 0.0
    %1442 = vmatpush1.xpose.msra.mxu0 %v1152
    %1443 = vmatprep.subr.mxu0 0.0
    %1444 = vmatpush1.xpose.msra.mxu0 %v1155
    %1445 = vmatprep.subr.mxu0 0.0
    %1446 = vmatpush1.xpose.msra.mxu0 %v1158
    %1447 = vmatprep.subr.mxu0 0.0
    %1448 = vmatpush1.xpose.msra.mxu0 %v1161
    %1449 = vmatprep.subr.mxu0 0.0
    %1450 = vmatpush1.xpose.msra.mxu0 %v1164
    %1451 = vmatprep.subr.mxu0 0.0
    %1452 = vmatpush1.xpose.msra.mxu0 %v1167
    %1453 = vmatprep.subr.mxu0 0.0
    %1454 = vmatpush1.xpose.msra.mxu0 %v1170
    %1455 = vmatprep.subr.mxu0 0.0
    %1456 = vmatpush1.xpose.msra.mxu0 %v1173
    %1457 = vmatprep.subr.mxu0 0.0
    %1458 = vmatpush1.xpose.msra.mxu0 %v1176
    %1459 = vmatprep.subr.mxu0 0.0
    %1460 = vmatpush1.xpose.msra.mxu0 %v1179
    %1461 = vmatprep.subr.mxu0 0.0
    %1462 = vmatpush1.xpose.msra.mxu0 %v1182
    %1463 = vmatprep.subr.mxu0 0.0
    %1464 = vmatpush1.xpose.msra.mxu0 %v1185
    %1465 = vmatprep.subr.mxu0 0.0
    %1466 = vmatpush1.xpose.msra.mxu0 %v1188
    %1467 = vmatprep.subr.mxu0 0.0
    %1468 = vmatpush1.xpose.msra.mxu0 %v1191
    %1469 = vmatprep.subr.mxu0 0.0
    %1470 = vmatpush1.xpose.msra.mxu0 %v1194
    %1471 = vmatprep.subr.mxu0 0.0
    %1472 = vmatpush1.xpose.msra.mxu0 %v1197
    %1473 = vmatprep.subr.mxu0 0.0
    %1474 = vmatpush1.xpose.msra.mxu0 %v1200
    %1475 = vmatprep.subr.mxu0 0.0
    %1476 = vmatpush1.xpose.msra.mxu0 %v1203
    %1477 = vmatprep.subr.mxu0 0.0
    %1478 = vmatpush1.xpose.msra.mxu0 %v1206
    %1479 = vmatprep.subr.mxu0 0.0
    %1480 = vmatpush1.xpose.msra.mxu0 0.0
    %1481 = vmatprep.subr.mxu0 0.0
    %1482 = vmatpush1.xpose.msra.mxu0 0.0
    %1483 = vmatprep.subr.mxu0 0.0
    %1484 = vmatpush1.xpose.msra.mxu0 0.0
    %1485 = vmatprep.mubr.f32.mxu0 0.0
    %1486 = vmatmul.mubr.f32.gmra.mrb[0].mxu0 %v831
    %v1487 = vpop.f32.mrb[0].mxu0
    %v1488 = vadd.f32 %v828, %v1487
    %v1489 = vpop.f32.mrb[0].mxu0
    %v1490 = vadd.f32 %v828, %v1489
    %1491 = vdwg.mxu0
    %v1500 = vcombine.low %v1275, %v1277
    %v1501 = vcombine.low %v1346, %v1348
    %v1502 = vcombine.low %v1417, %v1419
    %v1503 = vcombine.low %v1488, %v1490
    %v1505 = vunpack.c.l.s4 1966171168
    %v1506 = vunpack.c.0.s8 %v1505
    %v1507 = vlaneseq
    %v1508 = vshrl.u32 %v1507, 7
    %v1509 = vsub.s32 %v1506, %v1508
    %v1510 = vrot.slane %v1500, %v1509
    %v1512 = vunpack.c.l.s4 1966171168
    %v1513 = vunpack.c.0.s8 %v1512
    %v1514 = vlaneseq
    %v1515 = vshrl.u32 %v1514, 7
    %v1516 = vsub.s32 %v1513, %v1515
    %v1517 = vrot.slane %v1501, %v1516
    %v1519 = vunpack.c.l.s4 1966171168
    %v1520 = vunpack.c.0.s8 %v1519
    %v1521 = vlaneseq
    %v1522 = vshrl.u32 %v1521, 7
    %v1523 = vsub.s32 %v1520, %v1522
    %v1524 = vrot.slane %v1502, %v1523
    %v1526 = vunpack.c.l.s4 1966171168
    %v1527 = vunpack.c.0.s8 %v1526
    %v1528 = vlaneseq
    %v1529 = vshrl.u32 %v1528, 7
    %v1530 = vsub.s32 %v1527, %v1529
    %v1531 = vrot.slane %v1503, %v1530
    %v1532 = vcombine.low %v1510, %v1517
    %v1533 = vcombine.low %v1524, %v1531
    %v1535 = vunpack.c.l.s4 1966171168
    %v1536 = vunpack.c.0.s8 %v1535
    %v1537 = vlaneseq
    %v1538 = vshrl.u32 %v1537, 7
    %v1539 = vsub.s32 %v1536, %v1538
    %v1540 = vrot.slane %v1532, %v1539
    %v1542 = vunpack.c.l.s4 1966171168
    %v1543 = vunpack.c.0.s8 %v1542
    %v1544 = vlaneseq
    %v1545 = vshrl.u32 %v1544, 7
    %v1546 = vsub.s32 %v1543, %v1545
    %v1547 = vrot.slane %v1533, %v1546
    %v1548 = vcombine.low %v1540, %v1547
    %v1550 = vlaneseq
    %vm1551 = vcmp.ge.s32.totalorder %v1550, 0
    %vm1552 = vcmp.lt.s32.totalorder %v1550, 1000
    %vm1553 = vmand %vm1551, %vm1552
    %1554 = vst.msk [vmem:[#allocation3] sm:$0xff] %vm1553, %v1548
    // Predicated region
    $region42: #{tpu_custom_call.1} parent=1 // pred_check
      _
    $region43: #{tpu_custom_call.1} parent=1 // pred_check_branch
      %1556 = sbr.rel (0) target = $region45
    $region44: #{tpu_custom_call.1} parent=1 // pred_region
      %s1558 = ssub.s32 128, 128
      %1559 = vsyncadd [#allocation4], %s1558
      %s1561 = sshll.u32 [#allocation3], 4
      %s1562 = int_to_ptr.vmem [resolvable:$true] %s1561
      %1564 = dma.vmem_to_hbm [thread:$0]  %s1562, 128, %s10, [#allocation4]
    $region45: #{tpu_custom_call.1} parent=1 // pred_fallthru
      _
    // Predicated region
    $region46: #{tpu_custom_call.1} parent=1 // pred_check
      _
    $region47: #{tpu_custom_call.1} parent=1 // pred_check_branch
      %1566 = sbr.rel (0) target = $region49
    $region48: #{tpu_custom_call.1} parent=1 // pred_region
      %1567 = dma.done [#allocation4], 128
    $region49: #{tpu_custom_call.1} parent=1 // pred_fallthru
      _
    %1568 = vsyncpa [#allocation4], 1

</llo_original>
